<compile_context>
chip_gen: v6e
topology: v6e:2x2x1
jax: 0.10.0
libtpu: 0.0.40
codegen_flags: <defaults>
</compile_context>

<pallas_src>
import math

import jax
import jax.numpy as jnp
from jax.experimental import pallas as pl
from jax.experimental.pallas import tpu as pltpu

NUM_ELEMENTS = 23
IN_FEATURES = NUM_ELEMENTS * NUM_ELEMENTS   # 529
K_PAD = 640                                 # 5 * 128, lane-aligned K
HIDDEN = 512
OUT_FEATURES = 1


def _mlp_kernel(x_ref, w1_ref, b1_ref, w2_ref, b2_ref, o_ref):
    # x_ref:  (TM, 640)   w1_ref: (640, 512)  b1_ref: (1, 512)
    # w2_ref: (1, 512)    b2_ref: (1, 1)      o_ref:  (TM, 1)
    x = x_ref[...]

    # fc1 on the MXU with f32 accumulate. K is zero-padded to 640 so every
    # 128-lane chunk is full.
    # TODO(synk): optionally cast x/w1 to bf16 here for ~3-4x on the MXU if the
    # 1e-4 f32 tolerance can be relaxed.
    h = jnp.dot(x, w1_ref[...], preferred_element_type=jnp.float32) + b1_ref[...]

    # exact GELU (erf variant == PyTorch F.gelu default); erf runs on the EUP.
    inv_sqrt2 = jnp.float32(1.0 / math.sqrt(2.0))
    h = jnp.float32(0.5) * h * (jnp.float32(1.0) + jax.lax.erf(h * inv_sqrt2))

    # fc2 (N=1): VPU multiply + cross-lane (XLU) reduction instead of a nearly
    # empty 1-column MXU matmul — both units have slack while the MXU runs fc1.
    out = jnp.sum(h * w2_ref[...], axis=-1, keepdims=True) + b2_ref[...]
    o_ref[...] = out.astype(o_ref.dtype)


def mlp_forward(edge_attr, w1, b1, w2, b2, *, tile_m=512):
    """edge_attr: (E, 23, 23) float32 -> (E, 1) float32."""
    x = edge_attr.reshape(-1, IN_FEATURES).astype(jnp.float32)
    n_edges = x.shape[0]

    # Zero-pad K: 529 -> 640 (exact; zeros contribute nothing to the dot).
    x = jnp.pad(x, ((0, 0), (0, K_PAD - IN_FEATURES)))
    w1_p = jnp.pad(w1.astype(jnp.float32), ((0, K_PAD - IN_FEATURES), (0, 0)))

    # Row tiling: one block when E is small (no per-step pipeline overhead),
    # otherwise tile_m-row tiles.
    if n_edges <= tile_m:
        eff_tile = max(8, ((n_edges + 7) // 8) * 8)   # keep sublane-aligned
    else:
        eff_tile = tile_m
    n_pad = (-n_edges) % eff_tile
    if n_pad:
        x = jnp.pad(x, ((0, n_pad), (0, 0)))
    m_total = x.shape[0]
    grid = (m_total // eff_tile,)

    b1_2d = b1.reshape(1, HIDDEN).astype(jnp.float32)
    w2_row = w2.reshape(1, HIDDEN).astype(jnp.float32)     # (512,1) -> (1,512)
    b2_2d = b2.reshape(1, OUT_FEATURES).astype(jnp.float32)

    cost = pl.CostEstimate(
        flops=2 * m_total * K_PAD * HIDDEN + 4 * m_total * HIDDEN,
        transcendentals=m_total * HIDDEN,
        bytes_accessed=4 * (x.size + w1_p.size + b1_2d.size + w2_row.size
                            + b2_2d.size + m_total * OUT_FEATURES),
    )

    out = pl.pallas_call(
        _mlp_kernel,
        out_shape=jax.ShapeDtypeStruct((m_total, OUT_FEATURES), jnp.float32),
        grid_spec=pltpu.PrefetchScalarGridSpec(
            num_scalar_prefetch=0,
            grid=grid,
            in_specs=[
                pl.BlockSpec((eff_tile, K_PAD), lambda i: (i, 0)),
                pl.BlockSpec((K_PAD, HIDDEN), lambda i: (0, 0)),
                pl.BlockSpec((1, HIDDEN), lambda i: (0, 0)),
                pl.BlockSpec((1, HIDDEN), lambda i: (0, 0)),
                pl.BlockSpec((1, OUT_FEATURES), lambda i: (0, 0)),
            ],
            out_specs=pl.BlockSpec((eff_tile, OUT_FEATURES), lambda i: (i, 0)),
        ),
        compiler_params=pltpu.CompilerParams(
            dimension_semantics=("parallel",),
        ),
        cost_estimate=cost,
    )(x, w1_p, b1_2d, w2_row, b2_2d)

    return out[:n_edges]


def init_params(key):
    """Deterministic parameter init (same shapes as the PyTorch module)."""
    k1, k2, k3, k4 = jax.random.split(key, 4)
    # mimic nn.Linear default uniform(-1/sqrt(fan_in), 1/sqrt(fan_in))
    bound1 = 1.0 / math.sqrt(IN_FEATURES)
    bound2 = 1.0 / math.sqrt(HIDDEN)
    w1 = jax.random.uniform(k1, (IN_FEATURES, HIDDEN), jnp.float32, -bound1, bound1)
    b1 = jax.random.uniform(k2, (HIDDEN,), jnp.float32, -bound1, bound1)
    w2 = jax.random.uniform(k3, (HIDDEN, OUT_FEATURES), jnp.float32, -bound2, bound2)
    b2 = jax.random.uniform(k4, (OUT_FEATURES,), jnp.float32, -bound2, bound2)
    return w1, b1, w2, b2


def reference_forward(edge_attr, w1, b1, w2, b2):
    x = edge_attr.reshape(-1, IN_FEATURES)
    h = x @ w1 + b1
    h = jax.nn.gelu(h, approximate=False)
    return h @ w2 + b2


if __name__ == "__main__":
    key = jax.random.PRNGKey(0)
    k_params, k_small, k_large = jax.random.split(key, 3)

    w1, b1, w2, b2 = init_params(k_params)

    # Case 1: tiny edge count -> single grid step, one resident block.
    edge_small = jax.random.normal(k_small, (8, NUM_ELEMENTS, NUM_ELEMENTS), jnp.float32)
    out_s = jax.block_until_ready(mlp_forward(edge_small, w1, b1, w2, b2))
    ref_s = reference_forward(edge_small, w1, b1, w2, b2)
    assert out_s.shape == (8, 1), out_s.shape
    assert jnp.allclose(out_s, ref_s, atol=1e-4, rtol=1e-4)

    # Case 2: larger edge count -> multiple 512-row grid steps (tests tiling
    # + row-padding path; rows shard across TCs on v7x).
    edge_large = jax.random.normal(k_large, (1100, NUM_ELEMENTS, NUM_ELEMENTS), jnp.float32)
    out_l = jax.block_until_ready(mlp_forward(edge_large, w1, b1, w2, b2))
    ref_l = reference_forward(edge_large, w1, b1, w2, b2)
    assert out_l.shape == (1100, 1), out_l.shape
    assert jnp.allclose(out_l, ref_l, atol=1e-4, rtol=1e-4)

    print("KERNEL_OK")
</pallas_src>

<mosaic_0001>
module attributes {stable_mosaic.version = 11 : i64} {
  func.func @_mlp_kernel(%arg0: i32, %arg1: memref<8x640xf32, #tpu.memory_space<vmem>>, %arg2: memref<640x512xf32, #tpu.memory_space<vmem>>, %arg3: memref<1x512xf32, #tpu.memory_space<vmem>>, %arg4: memref<1x512xf32, #tpu.memory_space<vmem>>, %arg5: memref<1x1xf32, #tpu.memory_space<vmem>>, %arg6: memref<8x1xf32, #tpu.memory_space<vmem>>) attributes {dimension_semantics = [#tpu.dimension_semantics<parallel>], iteration_bounds = array<i64: 1>, scalar_prefetch = 0 : i64, scratch_operands = 0 : i64, tpu.core_type = #tpu.core_type<tc>, window_params = [{transform_indices = @transform_0, window_bounds = array<i64: 8, 640>}, {pipeline_mode = #tpu.pipeline_mode<synchronous>, transform_indices = @transform_1, window_bounds = array<i64: 640, 512>}, {pipeline_mode = #tpu.pipeline_mode<synchronous>, transform_indices = @transform_2, window_bounds = array<i64: 1, 512>}, {pipeline_mode = #tpu.pipeline_mode<synchronous>, transform_indices = @transform_3, window_bounds = array<i64: 1, 512>}, {pipeline_mode = #tpu.pipeline_mode<synchronous>, transform_indices = @transform_4, window_bounds = array<i64: 1, 1>}, {transform_indices = @transform_5, window_bounds = array<i64: 8, 1>}]} {
    %c0 = arith.constant 0 : index
    %c0_0 = arith.constant 0 : index
    %0 = vector.load %arg1[%c0, %c0_0] : memref<8x640xf32, #tpu.memory_space<vmem>>, vector<8x640xf32>
    %c0_1 = arith.constant 0 : index
    %c0_2 = arith.constant 0 : index
    %1 = vector.load %arg2[%c0_1, %c0_2] : memref<640x512xf32, #tpu.memory_space<vmem>>, vector<640x512xf32>
    %cst = arith.constant dense<0.000000e+00> : vector<8x512xf32>
    %2 = tpu.matmul %0, %1, %cst {dimension_numbers = #tpu.dot_dimension_numbers<[1], [0], [0], [1], [0, 0, 1, 1], [], []>} : vector<8x640xf32>, vector<640x512xf32>, vector<8x512xf32> -> vector<8x512xf32>
    %c0_3 = arith.constant 0 : index
    %c0_4 = arith.constant 0 : index
    %3 = vector.load %arg3[%c0_3, %c0_4] : memref<1x512xf32, #tpu.memory_space<vmem>>, vector<1x512xf32>
    %4 = vector.broadcast %3 : vector<1x512xf32> to vector<8x512xf32>
    %5 = arith.addf %2, %4 : vector<8x512xf32>
    %cst_5 = arith.constant 5.000000e-01 : f32
    %6 = vector.broadcast %cst_5 : f32 to vector<8x512xf32>
    %7 = arith.mulf %6, %5 : vector<8x512xf32>
    %cst_6 = arith.constant 0.707106769 : f32
    %8 = vector.broadcast %cst_6 : f32 to vector<8x512xf32>
    %9 = arith.mulf %5, %8 : vector<8x512xf32>
    %10 = math.erf %9 : vector<8x512xf32>
    %cst_7 = arith.constant 1.000000e+00 : f32
    %11 = vector.broadcast %cst_7 : f32 to vector<8x512xf32>
    %12 = arith.addf %11, %10 : vector<8x512xf32>
    %13 = arith.mulf %7, %12 : vector<8x512xf32>
    %c0_8 = arith.constant 0 : index
    %c0_9 = arith.constant 0 : index
    %14 = vector.load %arg4[%c0_8, %c0_9] : memref<1x512xf32, #tpu.memory_space<vmem>>, vector<1x512xf32>
    %15 = vector.broadcast %14 : vector<1x512xf32> to vector<8x512xf32>
    %16 = arith.mulf %13, %15 : vector<8x512xf32>
    %cst_10 = arith.constant dense<0.000000e+00> : vector<8xf32>
    %17 = vector.multi_reduction <add>, %16, %cst_10 [1] : vector<8x512xf32> to vector<8xf32>
    %18 = vector.shape_cast %17 : vector<8xf32> to vector<8x1xf32>
    %c0_11 = arith.constant 0 : index
    %c0_12 = arith.constant 0 : index
    %19 = vector.load %arg5[%c0_11, %c0_12] : memref<1x1xf32, #tpu.memory_space<vmem>>, vector<1x1xf32>
    %20 = vector.broadcast %19 : vector<1x1xf32> to vector<8x1xf32>
    %21 = arith.addf %18, %20 : vector<8x1xf32>
    %c0_13 = arith.constant 0 : index
    %c0_14 = arith.constant 0 : index
    %22 = vector.load %arg6[%c0_13, %c0_14] : memref<8x1xf32, #tpu.memory_space<vmem>>, vector<8x1xf32>
    tpu.vector_store %arg6[%c0_13, %c0_14], %21 {strides = array<i32>} : memref<8x1xf32, #tpu.memory_space<vmem>>, vector<8x1xf32>,
    return
  }
  func.func @transform_0(%arg0: i32) -> (i32, i32) {
    %c0_i32 = arith.constant 0 : i32
    %c0_i32_0 = arith.constant 0 : i32
    return %arg0, %c0_i32 : i32, i32
  }
  func.func @transform_1(%arg0: i32) -> (i32, i32) {
    %c0_i32 = arith.constant 0 : i32
    %c0_i32_0 = arith.constant 0 : i32
    %c0_i32_1 = arith.constant 0 : i32
    return %c0_i32, %c0_i32_0 : i32, i32
  }
  func.func @transform_2(%arg0: i32) -> (i32, i32) {
    %c0_i32 = arith.constant 0 : i32
    %c0_i32_0 = arith.constant 0 : i32
    %c0_i32_1 = arith.constant 0 : i32
    return %c0_i32, %c0_i32_0 : i32, i32
  }
  func.func @transform_3(%arg0: i32) -> (i32, i32) {
    %c0_i32 = arith.constant 0 : i32
    %c0_i32_0 = arith.constant 0 : i32
    %c0_i32_1 = arith.constant 0 : i32
    return %c0_i32, %c0_i32_0 : i32, i32
  }
  func.func @transform_4(%arg0: i32) -> (i32, i32) {
    %c0_i32 = arith.constant 0 : i32
    %c0_i32_0 = arith.constant 0 : i32
    %c0_i32_1 = arith.constant 0 : i32
    return %c0_i32, %c0_i32_0 : i32, i32
  }
  func.func @transform_5(%arg0: i32) -> (i32, i32) {
    %c0_i32 = arith.constant 0 : i32
    %c0_i32_0 = arith.constant 0 : i32
    return %arg0, %c0_i32 : i32, i32
  }
}

</mosaic_0001>

<llo_original>
// kernel: tpu_custom_call.1
$region0: #{tpu_custom_call.1}
  #allocation0 [shape = 'u32[]', space=smem, size = 0x4, offset = 0x4, fixed_abs, tag = 'smem constant byte address 0x4 - core index']
  #allocation1 [shape = 'u32[144,128]{1,0:T(1,128)}', space=vmem, size = 0x12000, scoped, tag = 'internal scratch']
  #allocation2 [shape = 'f32[1,1]{1,0:T(1,128)S(1)}', space=vmem, size = 0x200, scoped, tag = 'scoped memory for tpu_custom_call.1']
  %s0 = inlined_call_operand.hbm [shape: f32[8,640], index: 0, kind: input, shape index: {}]
  %s1 = inlined_call_operand.hbm [shape: f32[640,512], index: 1, kind: input, shape index: {}]
  %s2 = inlined_call_operand.hbm [shape: f32[1,512], index: 2, kind: input, shape index: {}]
  %s3 = inlined_call_operand.hbm [shape: f32[1,512], index: 3, kind: input, shape index: {}]
  %s4 = inlined_call_operand.<no memory space> [shape: f32[1,1], index: 4, kind: input, shape index: {}]
  %s5 = inlined_call_operand.vmem [shape: f32[8,1], index: 5, kind: output, shape index: {}]
  %s6 = sld [smem:[#allocation0]]
  $region46: #{tpu_custom_call.1} parent=0
    _
  %s8 = ssub.s32 1, %s6
  %s9 = scalar_select 0, %s8, %s6
  %v10 = vstv %s4
  %11 = vst [vmem:[#allocation2] sm:$0x1] %v10
  $region1: #{tpu_custom_call.1} parent=0
    #allocation3 [shape = 'u8[20480]{0}', space=vmem, size = 0x5000, scoped, tag = 'input window, operand 0, single buffered']
    #allocation4 [shape = 's32[1]{0}', space=sflag, size = 0x4, scoped, tag = 'scoped memory for tpu_custom_call.1']
    #allocation5 [shape = 'u8[1310720]{0}', space=vmem, size = 0x140000, scoped, tag = 'input window, operand 1, single buffered']
    #allocation6 [shape = 's32[1]{0}', space=sflag, size = 0x4, scoped, tag = 'scoped memory for tpu_custom_call.1']
    #allocation7 [shape = 'u8[2048]{0}', space=vmem, size = 0x800, scoped, tag = 'input window, operand 2, single buffered']
    #allocation8 [shape = 'u8[2048]{0}', space=vmem, size = 0x800, scoped, tag = 'input window, operand 3, single buffered']
    #allocation9 [shape = 's32[1]{0}', space=sflag, size = 0x4, scoped, tag = 'scoped memory for tpu_custom_call.1']
    %12 = vsyncpa [#allocation4], 0
    %13 = vsyncpa [#allocation6], 0
    %14 = vsyncpa [#allocation9], 0
    // Predicated region
    $region2: #{tpu_custom_call.1} parent=1 // pred_check
      _
    $region3: #{tpu_custom_call.1} parent=1 // pred_check_branch
      %16 = sbr.rel (0) target = $region5
    $region4: #{tpu_custom_call.1} parent=1 // pred_region
      %s18 = ssub.s32 640, 640
      %19 = vsyncadd [#allocation4], %s18
      %s21 = sshll.u32 [#allocation3], 4
      %s22 = int_to_ptr.vmem [resolvable:$true] %s21
      %24 = dma.hbm_to_vmem [thread:$0]  %s0, 640, %s22, [#allocation4]
    $region5: #{tpu_custom_call.1} parent=1 // pred_fallthru
      _
    // Predicated region
    $region6: #{tpu_custom_call.1} parent=1 // pred_check
      _
    $region7: #{tpu_custom_call.1} parent=1 // pred_check_branch
      %26 = sbr.rel (0) target = $region9
    $region8: #{tpu_custom_call.1} parent=1 // pred_region
      %s28 = ssub.s32 40960, 40960
      %29 = vsyncadd [#allocation6], %s28
      %s30 = sshll.u32 [#allocation5], 4
      %s31 = int_to_ptr.vmem [resolvable:$true] %s30
      %36 = dma.hbm_to_vmem [thread:$0]  %s1, 40960, %s31, [#allocation6], 512, 512, 32
    $region9: #{tpu_custom_call.1} parent=1 // pred_fallthru
      _
    // Predicated region
    $region10: #{tpu_custom_call.1} parent=1 // pred_check
      _
    $region11: #{tpu_custom_call.1} parent=1 // pred_check_branch
      %38 = sbr.rel (0) target = $region13
    $region12: #{tpu_custom_call.1} parent=1 // pred_region
      %s40 = ssub.s32 64, 64
      %41 = vsyncadd [#allocation6], %s40
      %s43 = sshll.u32 [#allocation7], 4
      %s44 = int_to_ptr.vmem [resolvable:$true] %s43
      %46 = dma.hbm_to_vmem [thread:$0]  %s2, 64, %s44, [#allocation6]
    $region13: #{tpu_custom_call.1} parent=1 // pred_fallthru
      _
    // Predicated region
    $region14: #{tpu_custom_call.1} parent=1 // pred_check
      _
    $region15: #{tpu_custom_call.1} parent=1 // pred_check_branch
      %48 = sbr.rel (0) target = $region17
    $region16: #{tpu_custom_call.1} parent=1 // pred_region
      %s50 = ssub.s32 64, 64
      %51 = vsyncadd [#allocation9], %s50
      %s53 = sshll.u32 [#allocation8], 4
      %s54 = int_to_ptr.vmem [resolvable:$true] %s53
      %56 = dma.hbm_to_vmem [thread:$0]  %s3, 64, %s54, [#allocation9]
    $region17: #{tpu_custom_call.1} parent=1 // pred_fallthru
      _
    // Predicated region
    $region18: #{tpu_custom_call.1} parent=1 // pred_check
      _
    $region19: #{tpu_custom_call.1} parent=1 // pred_check_branch
      %58 = sbr.rel (0) target = $region21
    $region20: #{tpu_custom_call.1} parent=1 // pred_region
      _
    $region21: #{tpu_custom_call.1} parent=1 // pred_fallthru
      _
    // Predicated region
    $region22: #{tpu_custom_call.1} parent=1 // pred_check
      _
    $region23: #{tpu_custom_call.1} parent=1 // pred_check_branch
      %60 = sbr.rel (0) target = $region25
    $region24: #{tpu_custom_call.1} parent=1 // pred_region
      %61 = dma.done [#allocation4], 640
    $region25: #{tpu_custom_call.1} parent=1 // pred_fallthru
      _
    // Predicated region
    $region26: #{tpu_custom_call.1} parent=1 // pred_check
      _
    $region27: #{tpu_custom_call.1} parent=1 // pred_check_branch
      %63 = sbr.rel (0) target = $region29
    $region28: #{tpu_custom_call.1} parent=1 // pred_region
      %64 = dma.done [#allocation6], 40960
    $region29: #{tpu_custom_call.1} parent=1 // pred_fallthru
      _
    // Predicated region
    $region30: #{tpu_custom_call.1} parent=1 // pred_check
      _
    $region31: #{tpu_custom_call.1} parent=1 // pred_check_branch
      %66 = sbr.rel (0) target = $region33
    $region32: #{tpu_custom_call.1} parent=1 // pred_region
      %67 = dma.done [#allocation6], 64
    $region33: #{tpu_custom_call.1} parent=1 // pred_fallthru
      _
    // Predicated region
    $region34: #{tpu_custom_call.1} parent=1 // pred_check
      _
    $region35: #{tpu_custom_call.1} parent=1 // pred_check_branch
      %69 = sbr.rel (0) target = $region37
    $region36: #{tpu_custom_call.1} parent=1 // pred_region
      %70 = dma.done [#allocation9], 64
    $region37: #{tpu_custom_call.1} parent=1 // pred_fallthru
      _
    %v71 = vld [vmem:[#allocation3] sm:$0xff]
    %v72 = vld [vmem:[#allocation3 + $0x8] sm:$0xff]
    %v73 = vld [vmem:[#allocation3 + $0x10] sm:$0xff]
    %v74 = vld [vmem:[#allocation3 + $0x18] sm:$0xff]
    %v75 = vld [vmem:[#allocation3 + $0x20] sm:$0xff]
    %v76 = vld [vmem:[#allocation5] sm:$0xff]
    %v77 = vld [vmem:[#allocation5 + $0x8] sm:$0xff]
    %v78 = vld [vmem:[#allocation5 + $0x10] sm:$0xff]
    %v79 = vld [vmem:[#allocation5 + $0x18] sm:$0xff]
    %v80 = vld [vmem:[#allocation5 + $0x20] sm:$0xff]
    %v81 = vld [vmem:[#allocation5 + $0x28] sm:$0xff]
    %v82 = vld [vmem:[#allocation5 + $0x30] sm:$0xff]
    %v83 = vld [vmem:[#allocation5 + $0x38] sm:$0xff]
    %v84 = vld [vmem:[#allocation5 + $0x40] sm:$0xff]
    %v85 = vld [vmem:[#allocation5 + $0x48] sm:$0xff]
    %v86 = vld [vmem:[#allocation5 + $0x50] sm:$0xff]
    %v87 = vld [vmem:[#allocation5 + $0x58] sm:$0xff]
    %v88 = vld [vmem:[#allocation5 + $0x60] sm:$0xff]
    %v89 = vld [vmem:[#allocation5 + $0x68] sm:$0xff]
    %v90 = vld [vmem:[#allocation5 + $0x70] sm:$0xff]
    %v91 = vld [vmem:[#allocation5 + $0x78] sm:$0xff]
    %v92 = vld [vmem:[#allocation5 + $0x80] sm:$0xff]
    %v93 = vld [vmem:[#allocation5 + $0x88] sm:$0xff]
    %v94 = vld [vmem:[#allocation5 + $0x90] sm:$0xff]
    %v95 = vld [vmem:[#allocation5 + $0x98] sm:$0xff]
    %v96 = vld [vmem:[#allocation5 + $0xa0] sm:$0xff]
    %v97 = vld [vmem:[#allocation5 + $0xa8] sm:$0xff]
    %v98 = vld [vmem:[#allocation5 + $0xb0] sm:$0xff]
    %v99 = vld [vmem:[#allocation5 + $0xb8] sm:$0xff]
    %v100 = vld [vmem:[#allocation5 + $0xc0] sm:$0xff]
    %v101 = vld [vmem:[#allocation5 + $0xc8] sm:$0xff]
    %v102 = vld [vmem:[#allocation5 + $0xd0] sm:$0xff]
    %v103 = vld [vmem:[#allocation5 + $0xd8] sm:$0xff]
    %v104 = vld [vmem:[#allocation5 + $0xe0] sm:$0xff]
    %v105 = vld [vmem:[#allocation5 + $0xe8] sm:$0xff]
    %v106 = vld [vmem:[#allocation5 + $0xf0] sm:$0xff]
    %v107 = vld [vmem:[#allocation5 + $0xf8] sm:$0xff]
    %v108 = vld [vmem:[#allocation5 + $0x100] sm:$0xff]
    %v109 = vld [vmem:[#allocation5 + $0x108] sm:$0xff]
    %v110 = vld [vmem:[#allocation5 + $0x110] sm:$0xff]
    %v111 = vld [vmem:[#allocation5 + $0x118] sm:$0xff]
    %v112 = vld [vmem:[#allocation5 + $0x120] sm:$0xff]
    %v113 = vld [vmem:[#allocation5 + $0x128] sm:$0xff]
    %v114 = vld [vmem:[#allocation5 + $0x130] sm:$0xff]
    %v115 = vld [vmem:[#allocation5 + $0x138] sm:$0xff]
    %v116 = vld [vmem:[#allocation5 + $0x140] sm:$0xff]
    %v117 = vld [vmem:[#allocation5 + $0x148] sm:$0xff]
    %v118 = vld [vmem:[#allocation5 + $0x150] sm:$0xff]
    %v119 = vld [vmem:[#allocation5 + $0x158] sm:$0xff]
    %v120 = vld [vmem:[#allocation5 + $0x160] sm:$0xff]
    %v121 = vld [vmem:[#allocation5 + $0x168] sm:$0xff]
    %v122 = vld [vmem:[#allocation5 + $0x170] sm:$0xff]
    %v123 = vld [vmem:[#allocation5 + $0x178] sm:$0xff]
    %v124 = vld [vmem:[#allocation5 + $0x180] sm:$0xff]
    %v125 = vld [vmem:[#allocation5 + $0x188] sm:$0xff]
    %v126 = vld [vmem:[#allocation5 + $0x190] sm:$0xff]
    %v127 = vld [vmem:[#allocation5 + $0x198] sm:$0xff]
    %v128 = vld [vmem:[#allocation5 + $0x1a0] sm:$0xff]
    %v129 = vld [vmem:[#allocation5 + $0x1a8] sm:$0xff]
    %v130 = vld [vmem:[#allocation5 + $0x1b0] sm:$0xff]
    %v131 = vld [vmem:[#allocation5 + $0x1b8] sm:$0xff]
    %v132 = vld [vmem:[#allocation5 + $0x1c0] sm:$0xff]
    %v133 = vld [vmem:[#allocation5 + $0x1c8] sm:$0xff]
    %v134 = vld [vmem:[#allocation5 + $0x1d0] sm:$0xff]
    %v135 = vld [vmem:[#allocation5 + $0x1d8] sm:$0xff]
    %v136 = vld [vmem:[#allocation5 + $0x1e0] sm:$0xff]
    %v137 = vld [vmem:[#allocation5 + $0x1e8] sm:$0xff]
    %v138 = vld [vmem:[#allocation5 + $0x1f0] sm:$0xff]
    %v139 = vld [vmem:[#allocation5 + $0x1f8] sm:$0xff]
    %v140 = vld [vmem:[#allocation5 + $0x200] sm:$0xff]
    %v141 = vld [vmem:[#allocation5 + $0x208] sm:$0xff]
    %v142 = vld [vmem:[#allocation5 + $0x210] sm:$0xff]
    %v143 = vld [vmem:[#allocation5 + $0x218] sm:$0xff]
    %v144 = vld [vmem:[#allocation5 + $0x220] sm:$0xff]
    %v145 = vld [vmem:[#allocation5 + $0x228] sm:$0xff]
    %v146 = vld [vmem:[#allocation5 + $0x230] sm:$0xff]
    %v147 = vld [vmem:[#allocation5 + $0x238] sm:$0xff]
    %v148 = vld [vmem:[#allocation5 + $0x240] sm:$0xff]
    %v149 = vld [vmem:[#allocation5 + $0x248] sm:$0xff]
    %v150 = vld [vmem:[#allocation5 + $0x250] sm:$0xff]
    %v151 = vld [vmem:[#allocation5 + $0x258] sm:$0xff]
    %v152 = vld [vmem:[#allocation5 + $0x260] sm:$0xff]
    %v153 = vld [vmem:[#allocation5 + $0x268] sm:$0xff]
    %v154 = vld [vmem:[#allocation5 + $0x270] sm:$0xff]
    %v155 = vld [vmem:[#allocation5 + $0x278] sm:$0xff]
    %v156 = vld [vmem:[#allocation5 + $0x280] sm:$0xff]
    %v157 = vld [vmem:[#allocation5 + $0x288] sm:$0xff]
    %v158 = vld [vmem:[#allocation5 + $0x290] sm:$0xff]
    %v159 = vld [vmem:[#allocation5 + $0x298] sm:$0xff]
    %v160 = vld [vmem:[#allocation5 + $0x2a0] sm:$0xff]
    %v161 = vld [vmem:[#allocation5 + $0x2a8] sm:$0xff]
    %v162 = vld [vmem:[#allocation5 + $0x2b0] sm:$0xff]
    %v163 = vld [vmem:[#allocation5 + $0x2b8] sm:$0xff]
    %v164 = vld [vmem:[#allocation5 + $0x2c0] sm:$0xff]
    %v165 = vld [vmem:[#allocation5 + $0x2c8] sm:$0xff]
    %v166 = vld [vmem:[#allocation5 + $0x2d0] sm:$0xff]
    %v167 = vld [vmem:[#allocation5 + $0x2d8] sm:$0xff]
    %v168 = vld [vmem:[#allocation5 + $0x2e0] sm:$0xff]
    %v169 = vld [vmem:[#allocation5 + $0x2e8] sm:$0xff]
    %v170 = vld [vmem:[#allocation5 + $0x2f0] sm:$0xff]
    %v171 = vld [vmem:[#allocation5 + $0x2f8] sm:$0xff]
    %v172 = vld [vmem:[#allocation5 + $0x300] sm:$0xff]
    %v173 = vld [vmem:[#allocation5 + $0x308] sm:$0xff]
    %v174 = vld [vmem:[#allocation5 + $0x310] sm:$0xff]
    %v175 = vld [vmem:[#allocation5 + $0x318] sm:$0xff]
    %v176 = vld [vmem:[#allocation5 + $0x320] sm:$0xff]
    %v177 = vld [vmem:[#allocation5 + $0x328] sm:$0xff]
    %v178 = vld [vmem:[#allocation5 + $0x330] sm:$0xff]
    %v179 = vld [vmem:[#allocation5 + $0x338] sm:$0xff]
    %v180 = vld [vmem:[#allocation5 + $0x340] sm:$0xff]
    %v181 = vld [vmem:[#allocation5 + $0x348] sm:$0xff]
    %v182 = vld [vmem:[#allocation5 + $0x350] sm:$0xff]
    %v183 = vld [vmem:[#allocation5 + $0x358] sm:$0xff]
    %v184 = vld [vmem:[#allocation5 + $0x360] sm:$0xff]
    %v185 = vld [vmem:[#allocation5 + $0x368] sm:$0xff]
    %v186 = vld [vmem:[#allocation5 + $0x370] sm:$0xff]
    %v187 = vld [vmem:[#allocation5 + $0x378] sm:$0xff]
    %v188 = vld [vmem:[#allocation5 + $0x380] sm:$0xff]
    %v189 = vld [vmem:[#allocation5 + $0x388] sm:$0xff]
    %v190 = vld [vmem:[#allocation5 + $0x390] sm:$0xff]
    %v191 = vld [vmem:[#allocation5 + $0x398] sm:$0xff]
    %v192 = vld [vmem:[#allocation5 + $0x3a0] sm:$0xff]
    %v193 = vld [vmem:[#allocation5 + $0x3a8] sm:$0xff]
    %v194 = vld [vmem:[#allocation5 + $0x3b0] sm:$0xff]
    %v195 = vld [vmem:[#allocation5 + $0x3b8] sm:$0xff]
    %v196 = vld [vmem:[#allocation5 + $0x3c0] sm:$0xff]
    %v197 = vld [vmem:[#allocation5 + $0x3c8] sm:$0xff]
    %v198 = vld [vmem:[#allocation5 + $0x3d0] sm:$0xff]
    %v199 = vld [vmem:[#allocation5 + $0x3d8] sm:$0xff]
    %v200 = vld [vmem:[#allocation5 + $0x3e0] sm:$0xff]
    %v201 = vld [vmem:[#allocation5 + $0x3e8] sm:$0xff]
    %v202 = vld [vmem:[#allocation5 + $0x3f0] sm:$0xff]
    %v203 = vld [vmem:[#allocation5 + $0x3f8] sm:$0xff]
    %v204 = vld [vmem:[#allocation5 + $0x400] sm:$0xff]
    %v205 = vld [vmem:[#allocation5 + $0x408] sm:$0xff]
    %v206 = vld [vmem:[#allocation5 + $0x410] sm:$0xff]
    %v207 = vld [vmem:[#allocation5 + $0x418] sm:$0xff]
    %v208 = vld [vmem:[#allocation5 + $0x420] sm:$0xff]
    %v209 = vld [vmem:[#allocation5 + $0x428] sm:$0xff]
    %v210 = vld [vmem:[#allocation5 + $0x430] sm:$0xff]
    %v211 = vld [vmem:[#allocation5 + $0x438] sm:$0xff]
    %v212 = vld [vmem:[#allocation5 + $0x440] sm:$0xff]
    %v213 = vld [vmem:[#allocation5 + $0x448] sm:$0xff]
    %v214 = vld [vmem:[#allocation5 + $0x450] sm:$0xff]
    %v215 = vld [vmem:[#allocation5 + $0x458] sm:$0xff]
    %v216 = vld [vmem:[#allocation5 + $0x460] sm:$0xff]
    %v217 = vld [vmem:[#allocation5 + $0x468] sm:$0xff]
    %v218 = vld [vmem:[#allocation5 + $0x470] sm:$0xff]
    %v219 = vld [vmem:[#allocation5 + $0x478] sm:$0xff]
    %v220 = vld [vmem:[#allocation5 + $0x480] sm:$0xff]
    %v221 = vld [vmem:[#allocation5 + $0x488] sm:$0xff]
    %v222 = vld [vmem:[#allocation5 + $0x490] sm:$0xff]
    %v223 = vld [vmem:[#allocation5 + $0x498] sm:$0xff]
    %v224 = vld [vmem:[#allocation5 + $0x4a0] sm:$0xff]
    %v225 = vld [vmem:[#allocation5 + $0x4a8] sm:$0xff]
    %v226 = vld [vmem:[#allocation5 + $0x4b0] sm:$0xff]
    %v227 = vld [vmem:[#allocation5 + $0x4b8] sm:$0xff]
    %v228 = vld [vmem:[#allocation5 + $0x4c0] sm:$0xff]
    %v229 = vld [vmem:[#allocation5 + $0x4c8] sm:$0xff]
    %v230 = vld [vmem:[#allocation5 + $0x4d0] sm:$0xff]
    %v231 = vld [vmem:[#allocation5 + $0x4d8] sm:$0xff]
    %v232 = vld [vmem:[#allocation5 + $0x4e0] sm:$0xff]
    %v233 = vld [vmem:[#allocation5 + $0x4e8] sm:$0xff]
    %v234 = vld [vmem:[#allocation5 + $0x4f0] sm:$0xff]
    %v235 = vld [vmem:[#allocation5 + $0x4f8] sm:$0xff]
    %v236 = vld [vmem:[#allocation5 + $0x500] sm:$0xff]
    %v237 = vld [vmem:[#allocation5 + $0x508] sm:$0xff]
    %v238 = vld [vmem:[#allocation5 + $0x510] sm:$0xff]
    %v239 = vld [vmem:[#allocation5 + $0x518] sm:$0xff]
    %v240 = vld [vmem:[#allocation5 + $0x520] sm:$0xff]
    %v241 = vld [vmem:[#allocation5 + $0x528] sm:$0xff]
    %v242 = vld [vmem:[#allocation5 + $0x530] sm:$0xff]
    %v243 = vld [vmem:[#allocation5 + $0x538] sm:$0xff]
    %v244 = vld [vmem:[#allocation5 + $0x540] sm:$0xff]
    %v245 = vld [vmem:[#allocation5 + $0x548] sm:$0xff]
    %v246 = vld [vmem:[#allocation5 + $0x550] sm:$0xff]
    %v247 = vld [vmem:[#allocation5 + $0x558] sm:$0xff]
    %v248 = vld [vmem:[#allocation5 + $0x560] sm:$0xff]
    %v249 = vld [vmem:[#allocation5 + $0x568] sm:$0xff]
    %v250 = vld [vmem:[#allocation5 + $0x570] sm:$0xff]
    %v251 = vld [vmem:[#allocation5 + $0x578] sm:$0xff]
    %v252 = vld [vmem:[#allocation5 + $0x580] sm:$0xff]
    %v253 = vld [vmem:[#allocation5 + $0x588] sm:$0xff]
    %v254 = vld [vmem:[#allocation5 + $0x590] sm:$0xff]
    %v255 = vld [vmem:[#allocation5 + $0x598] sm:$0xff]
    %v256 = vld [vmem:[#allocation5 + $0x5a0] sm:$0xff]
    %v257 = vld [vmem:[#allocation5 + $0x5a8] sm:$0xff]
    %v258 = vld [vmem:[#allocation5 + $0x5b0] sm:$0xff]
    %v259 = vld [vmem:[#allocation5 + $0x5b8] sm:$0xff]
    %v260 = vld [vmem:[#allocation5 + $0x5c0] sm:$0xff]
    %v261 = vld [vmem:[#allocation5 + $0x5c8] sm:$0xff]
    %v262 = vld [vmem:[#allocation5 + $0x5d0] sm:$0xff]
    %v263 = vld [vmem:[#allocation5 + $0x5d8] sm:$0xff]
    %v264 = vld [vmem:[#allocation5 + $0x5e0] sm:$0xff]
    %v265 = vld [vmem:[#allocation5 + $0x5e8] sm:$0xff]
    %v266 = vld [vmem:[#allocation5 + $0x5f0] sm:$0xff]
    %v267 = vld [vmem:[#allocation5 + $0x5f8] sm:$0xff]
    %v268 = vld [vmem:[#allocation5 + $0x600] sm:$0xff]
    %v269 = vld [vmem:[#allocation5 + $0x608] sm:$0xff]
    %v270 = vld [vmem:[#allocation5 + $0x610] sm:$0xff]
    %v271 = vld [vmem:[#allocation5 + $0x618] sm:$0xff]
    %v272 = vld [vmem:[#allocation5 + $0x620] sm:$0xff]
    %v273 = vld [vmem:[#allocation5 + $0x628] sm:$0xff]
    %v274 = vld [vmem:[#allocation5 + $0x630] sm:$0xff]
    %v275 = vld [vmem:[#allocation5 + $0x638] sm:$0xff]
    %v276 = vld [vmem:[#allocation5 + $0x640] sm:$0xff]
    %v277 = vld [vmem:[#allocation5 + $0x648] sm:$0xff]
    %v278 = vld [vmem:[#allocation5 + $0x650] sm:$0xff]
    %v279 = vld [vmem:[#allocation5 + $0x658] sm:$0xff]
    %v280 = vld [vmem:[#allocation5 + $0x660] sm:$0xff]
    %v281 = vld [vmem:[#allocation5 + $0x668] sm:$0xff]
    %v282 = vld [vmem:[#allocation5 + $0x670] sm:$0xff]
    %v283 = vld [vmem:[#allocation5 + $0x678] sm:$0xff]
    %v284 = vld [vmem:[#allocation5 + $0x680] sm:$0xff]
    %v285 = vld [vmem:[#allocation5 + $0x688] sm:$0xff]
    %v286 = vld [vmem:[#allocation5 + $0x690] sm:$0xff]
    %v287 = vld [vmem:[#allocation5 + $0x698] sm:$0xff]
    %v288 = vld [vmem:[#allocation5 + $0x6a0] sm:$0xff]
    %v289 = vld [vmem:[#allocation5 + $0x6a8] sm:$0xff]
    %v290 = vld [vmem:[#allocation5 + $0x6b0] sm:$0xff]
    %v291 = vld [vmem:[#allocation5 + $0x6b8] sm:$0xff]
    %v292 = vld [vmem:[#allocation5 + $0x6c0] sm:$0xff]
    %v293 = vld [vmem:[#allocation5 + $0x6c8] sm:$0xff]
    %v294 = vld [vmem:[#allocation5 + $0x6d0] sm:$0xff]
    %v295 = vld [vmem:[#allocation5 + $0x6d8] sm:$0xff]
    %v296 = vld [vmem:[#allocation5 + $0x6e0] sm:$0xff]
    %v297 = vld [vmem:[#allocation5 + $0x6e8] sm:$0xff]
    %v298 = vld [vmem:[#allocation5 + $0x6f0] sm:$0xff]
    %v299 = vld [vmem:[#allocation5 + $0x6f8] sm:$0xff]
    %v300 = vld [vmem:[#allocation5 + $0x700] sm:$0xff]
    %v301 = vld [vmem:[#allocation5 + $0x708] sm:$0xff]
    %v302 = vld [vmem:[#allocation5 + $0x710] sm:$0xff]
    %v303 = vld [vmem:[#allocation5 + $0x718] sm:$0xff]
    %v304 = vld [vmem:[#allocation5 + $0x720] sm:$0xff]
    %v305 = vld [vmem:[#allocation5 + $0x728] sm:$0xff]
    %v306 = vld [vmem:[#allocation5 + $0x730] sm:$0xff]
    %v307 = vld [vmem:[#allocation5 + $0x738] sm:$0xff]
    %v308 = vld [vmem:[#allocation5 + $0x740] sm:$0xff]
    %v309 = vld [vmem:[#allocation5 + $0x748] sm:$0xff]
    %v310 = vld [vmem:[#allocation5 + $0x750] sm:$0xff]
    %v311 = vld [vmem:[#allocation5 + $0x758] sm:$0xff]
    %v312 = vld [vmem:[#allocation5 + $0x760] sm:$0xff]
    %v313 = vld [vmem:[#allocation5 + $0x768] sm:$0xff]
    %v314 = vld [vmem:[#allocation5 + $0x770] sm:$0xff]
    %v315 = vld [vmem:[#allocation5 + $0x778] sm:$0xff]
    %v316 = vld [vmem:[#allocation5 + $0x780] sm:$0xff]
    %v317 = vld [vmem:[#allocation5 + $0x788] sm:$0xff]
    %v318 = vld [vmem:[#allocation5 + $0x790] sm:$0xff]
    %v319 = vld [vmem:[#allocation5 + $0x798] sm:$0xff]
    %v320 = vld [vmem:[#allocation5 + $0x7a0] sm:$0xff]
    %v321 = vld [vmem:[#allocation5 + $0x7a8] sm:$0xff]
    %v322 = vld [vmem:[#allocation5 + $0x7b0] sm:$0xff]
    %v323 = vld [vmem:[#allocation5 + $0x7b8] sm:$0xff]
    %v324 = vld [vmem:[#allocation5 + $0x7c0] sm:$0xff]
    %v325 = vld [vmem:[#allocation5 + $0x7c8] sm:$0xff]
    %v326 = vld [vmem:[#allocation5 + $0x7d0] sm:$0xff]
    %v327 = vld [vmem:[#allocation5 + $0x7d8] sm:$0xff]
    %v328 = vld [vmem:[#allocation5 + $0x7e0] sm:$0xff]
    %v329 = vld [vmem:[#allocation5 + $0x7e8] sm:$0xff]
    %v330 = vld [vmem:[#allocation5 + $0x7f0] sm:$0xff]
    %v331 = vld [vmem:[#allocation5 + $0x7f8] sm:$0xff]
    %v332 = vld [vmem:[#allocation5 + $0x800] sm:$0xff]
    %v333 = vld [vmem:[#allocation5 + $0x808] sm:$0xff]
    %v334 = vld [vmem:[#allocation5 + $0x810] sm:$0xff]
    %v335 = vld [vmem:[#allocation5 + $0x818] sm:$0xff]
    %v336 = vld [vmem:[#allocation5 + $0x820] sm:$0xff]
    %v337 = vld [vmem:[#allocation5 + $0x828] sm:$0xff]
    %v338 = vld [vmem:[#allocation5 + $0x830] sm:$0xff]
    %v339 = vld [vmem:[#allocation5 + $0x838] sm:$0xff]
    %v340 = vld [vmem:[#allocation5 + $0x840] sm:$0xff]
    %v341 = vld [vmem:[#allocation5 + $0x848] sm:$0xff]
    %v342 = vld [vmem:[#allocation5 + $0x850] sm:$0xff]
    %v343 = vld [vmem:[#allocation5 + $0x858] sm:$0xff]
    %v344 = vld [vmem:[#allocation5 + $0x860] sm:$0xff]
    %v345 = vld [vmem:[#allocation5 + $0x868] sm:$0xff]
    %v346 = vld [vmem:[#allocation5 + $0x870] sm:$0xff]
    %v347 = vld [vmem:[#allocation5 + $0x878] sm:$0xff]
    %v348 = vld [vmem:[#allocation5 + $0x880] sm:$0xff]
    %v349 = vld [vmem:[#allocation5 + $0x888] sm:$0xff]
    %v350 = vld [vmem:[#allocation5 + $0x890] sm:$0xff]
    %v351 = vld [vmem:[#allocation5 + $0x898] sm:$0xff]
    %v352 = vld [vmem:[#allocation5 + $0x8a0] sm:$0xff]
    %v353 = vld [vmem:[#allocation5 + $0x8a8] sm:$0xff]
    %v354 = vld [vmem:[#allocation5 + $0x8b0] sm:$0xff]
    %v355 = vld [vmem:[#allocation5 + $0x8b8] sm:$0xff]
    %v356 = vld [vmem:[#allocation5 + $0x8c0] sm:$0xff]
    %v357 = vld [vmem:[#allocation5 + $0x8c8] sm:$0xff]
    %v358 = vld [vmem:[#allocation5 + $0x8d0] sm:$0xff]
    %v359 = vld [vmem:[#allocation5 + $0x8d8] sm:$0xff]
    %v360 = vld [vmem:[#allocation5 + $0x8e0] sm:$0xff]
    %v361 = vld [vmem:[#allocation5 + $0x8e8] sm:$0xff]
    %v362 = vld [vmem:[#allocation5 + $0x8f0] sm:$0xff]
    %v363 = vld [vmem:[#allocation5 + $0x8f8] sm:$0xff]
    %v364 = vld [vmem:[#allocation5 + $0x900] sm:$0xff]
    %v365 = vld [vmem:[#allocation5 + $0x908] sm:$0xff]
    %v366 = vld [vmem:[#allocation5 + $0x910] sm:$0xff]
    %v367 = vld [vmem:[#allocation5 + $0x918] sm:$0xff]
    %v368 = vld [vmem:[#allocation5 + $0x920] sm:$0xff]
    %v369 = vld [vmem:[#allocation5 + $0x928] sm:$0xff]
    %v370 = vld [vmem:[#allocation5 + $0x930] sm:$0xff]
    %v371 = vld [vmem:[#allocation5 + $0x938] sm:$0xff]
    %v372 = vld [vmem:[#allocation5 + $0x940] sm:$0xff]
    %v373 = vld [vmem:[#allocation5 + $0x948] sm:$0xff]
    %v374 = vld [vmem:[#allocation5 + $0x950] sm:$0xff]
    %v375 = vld [vmem:[#allocation5 + $0x958] sm:$0xff]
    %v376 = vld [vmem:[#allocation5 + $0x960] sm:$0xff]
    %v377 = vld [vmem:[#allocation5 + $0x968] sm:$0xff]
    %v378 = vld [vmem:[#allocation5 + $0x970] sm:$0xff]
    %v379 = vld [vmem:[#allocation5 + $0x978] sm:$0xff]
    %v380 = vld [vmem:[#allocation5 + $0x980] sm:$0xff]
    %v381 = vld [vmem:[#allocation5 + $0x988] sm:$0xff]
    %v382 = vld [vmem:[#allocation5 + $0x990] sm:$0xff]
    %v383 = vld [vmem:[#allocation5 + $0x998] sm:$0xff]
    %v384 = vld [vmem:[#allocation5 + $0x9a0] sm:$0xff]
    %v385 = vld [vmem:[#allocation5 + $0x9a8] sm:$0xff]
    %v386 = vld [vmem:[#allocation5 + $0x9b0] sm:$0xff]
    %v387 = vld [vmem:[#allocation5 + $0x9b8] sm:$0xff]
    %v388 = vld [vmem:[#allocation5 + $0x9c0] sm:$0xff]
    %v389 = vld [vmem:[#allocation5 + $0x9c8] sm:$0xff]
    %v390 = vld [vmem:[#allocation5 + $0x9d0] sm:$0xff]
    %v391 = vld [vmem:[#allocation5 + $0x9d8] sm:$0xff]
    %v392 = vld [vmem:[#allocation5 + $0x9e0] sm:$0xff]
    %v393 = vld [vmem:[#allocation5 + $0x9e8] sm:$0xff]
    %v394 = vld [vmem:[#allocation5 + $0x9f0] sm:$0xff]
    %v395 = vld [vmem:[#allocation5 + $0x9f8] sm:$0xff]
    %v396 = vld [vmem:[#allocation7] sm:$0xf]
    %v398 = vlaneseq
    %v399 = vshrl.u32 %v398, 7
    %v400 = vsub.s32 0, %v399
    %v401 = vrot.slane %v396, %v400
    %v402 = vlaneseq
    %v403 = vshrl.u32 %v402, 7
    %v404 = vsub.s32 1, %v403
    %v405 = vrot.slane %v396, %v404
    %v406 = vlaneseq
    %v407 = vshrl.u32 %v406, 7
    %v408 = vsub.s32 2, %v407
    %v409 = vrot.slane %v396, %v408
    %v410 = vlaneseq
    %v411 = vshrl.u32 %v410, 7
    %v412 = vsub.s32 3, %v411
    %v413 = vrot.slane %v396, %v412
    %418 = vmatprep.subr.mxu0 %v137
    %419 = vmatpush1.msra.mxu0 %v136
    %420 = vmatprep.subr.mxu0 %v133
    %421 = vmatpush1.msra.mxu0 %v132
    %422 = vmatprep.subr.mxu0 %v129
    %423 = vmatpush1.msra.mxu0 %v128
    %424 = vmatprep.subr.mxu0 %v125
    %425 = vmatpush1.msra.mxu0 %v124
    %426 = vmatprep.subr.mxu0 %v121
    %427 = vmatpush1.msra.mxu0 %v120
    %428 = vmatprep.subr.mxu0 %v117
    %429 = vmatpush1.msra.mxu0 %v116
    %430 = vmatprep.subr.mxu0 %v113
    %431 = vmatpush1.msra.mxu0 %v112
    %432 = vmatprep.subr.mxu0 %v109
    %433 = vmatpush1.msra.mxu0 %v108
    %434 = vmatprep.subr.mxu0 %v105
    %435 = vmatpush1.msra.mxu0 %v104
    %436 = vmatprep.subr.mxu0 %v101
    %437 = vmatpush1.msra.mxu0 %v100
    %438 = vmatprep.subr.mxu0 %v97
    %439 = vmatpush1.msra.mxu0 %v96
    %440 = vmatprep.subr.mxu0 %v93
    %441 = vmatpush1.msra.mxu0 %v92
    %442 = vmatprep.subr.mxu0 %v89
    %443 = vmatpush1.msra.mxu0 %v88
    %444 = vmatprep.subr.mxu0 %v85
    %445 = vmatpush1.msra.mxu0 %v84
    %446 = vmatprep.subr.mxu0 %v81
    %447 = vmatpush1.msra.mxu0 %v80
    %448 = vmatprep.subr.mxu0 %v77
    %449 = vmatpush1.msra.mxu0 %v76
    %450 = vmatprep.subr.mxu0 %v201
    %451 = vmatpush2.msra.mxu0 %v200
    %452 = vmatprep.subr.mxu0 %v197
    %453 = vmatpush2.msra.mxu0 %v196
    %454 = vmatprep.subr.mxu0 %v193
    %455 = vmatpush2.msra.mxu0 %v192
    %456 = vmatprep.subr.mxu0 %v189
    %457 = vmatpush2.msra.mxu0 %v188
    %458 = vmatprep.subr.mxu0 %v185
    %459 = vmatpush2.msra.mxu0 %v184
    %460 = vmatprep.subr.mxu0 %v181
    %461 = vmatpush2.msra.mxu0 %v180
    %462 = vmatprep.subr.mxu0 %v177
    %463 = vmatpush2.msra.mxu0 %v176
    %464 = vmatprep.subr.mxu0 %v173
    %465 = vmatpush2.msra.mxu0 %v172
    %466 = vmatprep.subr.mxu0 %v169
    %467 = vmatpush2.msra.mxu0 %v168
    %468 = vmatprep.subr.mxu0 %v165
    %469 = vmatpush2.msra.mxu0 %v164
    %470 = vmatprep.subr.mxu0 %v161
    %471 = vmatpush2.msra.mxu0 %v160
    %472 = vmatprep.subr.mxu0 %v157
    %473 = vmatpush2.msra.mxu0 %v156
    %474 = vmatprep.subr.mxu0 %v153
    %475 = vmatpush2.msra.mxu0 %v152
    %476 = vmatprep.subr.mxu0 %v149
    %477 = vmatpush2.msra.mxu0 %v148
    %478 = vmatprep.subr.mxu0 %v145
    %479 = vmatpush2.msra.mxu0 %v144
    %480 = vmatprep.subr.mxu0 %v141
    %481 = vmatpush2.msra.mxu0 %v140
    %482 = vmatprep.mubr.f32.mxu0 %v72
    %483 = vmatmul.mubr.f32.gmra.mxu0 %v71
    %v484 = vpop.f32.mrf.mxu0
    %v485 = vadd.f32 %v401, %v484
    %v486 = vpop.f32.mrf.mxu0
    %v487 = vadd.f32 %v405, %v486
    %488 = vdwg.mxu0
    %489 = vmatprep.subr.mxu0 %v265
    %490 = vmatpush1.msra.mxu0 %v264
    %491 = vmatprep.subr.mxu0 %v261
    %492 = vmatpush1.msra.mxu0 %v260
    %493 = vmatprep.subr.mxu0 %v257
    %494 = vmatpush1.msra.mxu0 %v256
    %495 = vmatprep.subr.mxu0 %v253
    %496 = vmatpush1.msra.mxu0 %v252
    %497 = vmatprep.subr.mxu0 %v249
    %498 = vmatpush1.msra.mxu0 %v248
    %499 = vmatprep.subr.mxu0 %v245
    %500 = vmatpush1.msra.mxu0 %v244
    %501 = vmatprep.subr.mxu0 %v241
    %502 = vmatpush1.msra.mxu0 %v240
    %503 = vmatprep.subr.mxu0 %v237
    %504 = vmatpush1.msra.mxu0 %v236
    %505 = vmatprep.subr.mxu0 %v233
    %506 = vmatpush1.msra.mxu0 %v232
    %507 = vmatprep.subr.mxu0 %v229
    %508 = vmatpush1.msra.mxu0 %v228
    %509 = vmatprep.subr.mxu0 %v225
    %510 = vmatpush1.msra.mxu0 %v224
    %511 = vmatprep.subr.mxu0 %v221
    %512 = vmatpush1.msra.mxu0 %v220
    %513 = vmatprep.subr.mxu0 %v217
    %514 = vmatpush1.msra.mxu0 %v216
    %515 = vmatprep.subr.mxu0 %v213
    %516 = vmatpush1.msra.mxu0 %v212
    %517 = vmatprep.subr.mxu0 %v209
    %518 = vmatpush1.msra.mxu0 %v208
    %519 = vmatprep.subr.mxu0 %v205
    %520 = vmatpush1.msra.mxu0 %v204
    %521 = vmatprep.subr.mxu0 %v329
    %522 = vmatpush2.msra.mxu0 %v328
    %523 = vmatprep.subr.mxu0 %v325
    %524 = vmatpush2.msra.mxu0 %v324
    %525 = vmatprep.subr.mxu0 %v321
    %526 = vmatpush2.msra.mxu0 %v320
    %527 = vmatprep.subr.mxu0 %v317
    %528 = vmatpush2.msra.mxu0 %v316
    %529 = vmatprep.subr.mxu0 %v313
    %530 = vmatpush2.msra.mxu0 %v312
    %531 = vmatprep.subr.mxu0 %v309
    %532 = vmatpush2.msra.mxu0 %v308
    %533 = vmatprep.subr.mxu0 %v305
    %534 = vmatpush2.msra.mxu0 %v304
    %535 = vmatprep.subr.mxu0 %v301
    %536 = vmatpush2.msra.mxu0 %v300
    %537 = vmatprep.subr.mxu0 %v297
    %538 = vmatpush2.msra.mxu0 %v296
    %539 = vmatprep.subr.mxu0 %v293
    %540 = vmatpush2.msra.mxu0 %v292
    %541 = vmatprep.subr.mxu0 %v289
    %542 = vmatpush2.msra.mxu0 %v288
    %543 = vmatprep.subr.mxu0 %v285
    %544 = vmatpush2.msra.mxu0 %v284
    %545 = vmatprep.subr.mxu0 %v281
    %546 = vmatpush2.msra.mxu0 %v280
    %547 = vmatprep.subr.mxu0 %v277
    %548 = vmatpush2.msra.mxu0 %v276
    %549 = vmatprep.subr.mxu0 %v273
    %550 = vmatpush2.msra.mxu0 %v272
    %551 = vmatprep.subr.mxu0 %v269
    %552 = vmatpush2.msra.mxu0 %v268
    %553 = vmatprep.mubr.f32.mxu0 %v74
    %554 = vmatmul.mubr.f32.gmra.mxu0 %v73
    %v555 = vpop.f32.mrf.mxu0
    %v556 = vadd.f32 %v485, %v555
    %v557 = vpop.f32.mrf.mxu0
    %v558 = vadd.f32 %v487, %v557
    %559 = vdwg.mxu0
    %560 = vmatprep.subr.mxu0 %v393
    %561 = vmatpush1.msra.mxu0 %v392
    %562 = vmatprep.subr.mxu0 %v389
    %563 = vmatpush1.msra.mxu0 %v388
    %564 = vmatprep.subr.mxu0 %v385
    %565 = vmatpush1.msra.mxu0 %v384
    %566 = vmatprep.subr.mxu0 %v381
    %567 = vmatpush1.msra.mxu0 %v380
    %568 = vmatprep.subr.mxu0 %v377
    %569 = vmatpush1.msra.mxu0 %v376
    %570 = vmatprep.subr.mxu0 %v373
    %571 = vmatpush1.msra.mxu0 %v372
    %572 = vmatprep.subr.mxu0 %v369
    %573 = vmatpush1.msra.mxu0 %v368
    %574 = vmatprep.subr.mxu0 %v365
    %575 = vmatpush1.msra.mxu0 %v364
    %576 = vmatprep.subr.mxu0 %v361
    %577 = vmatpush1.msra.mxu0 %v360
    %578 = vmatprep.subr.mxu0 %v357
    %579 = vmatpush1.msra.mxu0 %v356
    %580 = vmatprep.subr.mxu0 %v353
    %581 = vmatpush1.msra.mxu0 %v352
    %582 = vmatprep.subr.mxu0 %v349
    %583 = vmatpush1.msra.mxu0 %v348
    %584 = vmatprep.subr.mxu0 %v345
    %585 = vmatpush1.msra.mxu0 %v344
    %586 = vmatprep.subr.mxu0 %v341
    %587 = vmatpush1.msra.mxu0 %v340
    %588 = vmatprep.subr.mxu0 %v337
    %589 = vmatpush1.msra.mxu0 %v336
    %590 = vmatprep.subr.mxu0 %v333
    %591 = vmatpush1.msra.mxu0 %v332
    %592 = vmatprep.subr.mxu0 0.0
    %593 = vmatpush2.msra.mxu0 0.0
    %594 = vmatprep.subr.mxu0 0.0
    %595 = vmatpush2.msra.mxu0 0.0
    %596 = vmatprep.subr.mxu0 0.0
    %597 = vmatpush2.msra.mxu0 0.0
    %598 = vmatprep.subr.mxu0 0.0
    %599 = vmatpush2.msra.mxu0 0.0
    %600 = vmatprep.subr.mxu0 0.0
    %601 = vmatpush2.msra.mxu0 0.0
    %602 = vmatprep.subr.mxu0 0.0
    %603 = vmatpush2.msra.mxu0 0.0
    %604 = vmatprep.subr.mxu0 0.0
    %605 = vmatpush2.msra.mxu0 0.0
    %606 = vmatprep.subr.mxu0 0.0
    %607 = vmatpush2.msra.mxu0 0.0
    %608 = vmatprep.subr.mxu0 0.0
    %609 = vmatpush2.msra.mxu0 0.0
    %610 = vmatprep.subr.mxu0 0.0
    %611 = vmatpush2.msra.mxu0 0.0
    %612 = vmatprep.subr.mxu0 0.0
    %613 = vmatpush2.msra.mxu0 0.0
    %614 = vmatprep.subr.mxu0 0.0
    %615 = vmatpush2.msra.mxu0 0.0
    %616 = vmatprep.subr.mxu0 0.0
    %617 = vmatpush2.msra.mxu0 0.0
    %618 = vmatprep.subr.mxu0 0.0
    %619 = vmatpush2.msra.mxu0 0.0
    %620 = vmatprep.subr.mxu0 0.0
    %621 = vmatpush2.msra.mxu0 0.0
    %622 = vmatprep.subr.mxu0 0.0
    %623 = vmatpush2.msra.mxu0 0.0
    %624 = vmatprep.mubr.f32.mxu0 0.0
    %625 = vmatmul.mubr.f32.gmra.mxu0 %v75
    %v626 = vpop.f32.mrf.mxu0
    %v627 = vadd.f32 %v556, %v626
    %v628 = vpop.f32.mrf.mxu0
    %v629 = vadd.f32 %v558, %v628
    %630 = vdwg.mxu0
    %631 = vmatprep.subr.mxu0 %v139
    %632 = vmatpush1.msra.mxu0 %v138
    %633 = vmatprep.subr.mxu0 %v135
    %634 = vmatpush1.msra.mxu0 %v134
    %635 = vmatprep.subr.mxu0 %v131
    %636 = vmatpush1.msra.mxu0 %v130
    %637 = vmatprep.subr.mxu0 %v127
    %638 = vmatpush1.msra.mxu0 %v126
    %639 = vmatprep.subr.mxu0 %v123
    %640 = vmatpush1.msra.mxu0 %v122
    %641 = vmatprep.subr.mxu0 %v119
    %642 = vmatpush1.msra.mxu0 %v118
    %643 = vmatprep.subr.mxu0 %v115
    %644 = vmatpush1.msra.mxu0 %v114
    %645 = vmatprep.subr.mxu0 %v111
    %646 = vmatpush1.msra.mxu0 %v110
    %647 = vmatprep.subr.mxu0 %v107
    %648 = vmatpush1.msra.mxu0 %v106
    %649 = vmatprep.subr.mxu0 %v103
    %650 = vmatpush1.msra.mxu0 %v102
    %651 = vmatprep.subr.mxu0 %v99
    %652 = vmatpush1.msra.mxu0 %v98
    %653 = vmatprep.subr.mxu0 %v95
    %654 = vmatpush1.msra.mxu0 %v94
    %655 = vmatprep.subr.mxu0 %v91
    %656 = vmatpush1.msra.mxu0 %v90
    %657 = vmatprep.subr.mxu0 %v87
    %658 = vmatpush1.msra.mxu0 %v86
    %659 = vmatprep.subr.mxu0 %v83
    %660 = vmatpush1.msra.mxu0 %v82
    %661 = vmatprep.subr.mxu0 %v79
    %662 = vmatpush1.msra.mxu0 %v78
    %663 = vmatprep.subr.mxu0 %v203
    %664 = vmatpush2.msra.mxu0 %v202
    %665 = vmatprep.subr.mxu0 %v199
    %666 = vmatpush2.msra.mxu0 %v198
    %667 = vmatprep.subr.mxu0 %v195
    %668 = vmatpush2.msra.mxu0 %v194
    %669 = vmatprep.subr.mxu0 %v191
    %670 = vmatpush2.msra.mxu0 %v190
    %671 = vmatprep.subr.mxu0 %v187
    %672 = vmatpush2.msra.mxu0 %v186
    %673 = vmatprep.subr.mxu0 %v183
    %674 = vmatpush2.msra.mxu0 %v182
    %675 = vmatprep.subr.mxu0 %v179
    %676 = vmatpush2.msra.mxu0 %v178
    %677 = vmatprep.subr.mxu0 %v175
    %678 = vmatpush2.msra.mxu0 %v174
    %679 = vmatprep.subr.mxu0 %v171
    %680 = vmatpush2.msra.mxu0 %v170
    %681 = vmatprep.subr.mxu0 %v167
    %682 = vmatpush2.msra.mxu0 %v166
    %683 = vmatprep.subr.mxu0 %v163
    %684 = vmatpush2.msra.mxu0 %v162
    %685 = vmatprep.subr.mxu0 %v159
    %686 = vmatpush2.msra.mxu0 %v158
    %687 = vmatprep.subr.mxu0 %v155
    %688 = vmatpush2.msra.mxu0 %v154
    %689 = vmatprep.subr.mxu0 %v151
    %690 = vmatpush2.msra.mxu0 %v150
    %691 = vmatprep.subr.mxu0 %v147
    %692 = vmatpush2.msra.mxu0 %v146
    %693 = vmatprep.subr.mxu0 %v143
    %694 = vmatpush2.msra.mxu0 %v142
    %695 = vmatprep.mubr.f32.mxu0 %v72
    %696 = vmatmul.mubr.f32.gmra.mxu0 %v71
    %v697 = vpop.f32.mrf.mxu0
    %v698 = vadd.f32 %v409, %v697
    %v699 = vpop.f32.mrf.mxu0
    %v700 = vadd.f32 %v413, %v699
    %701 = vdwg.mxu0
    %702 = vmatprep.subr.mxu0 %v267
    %703 = vmatpush1.msra.mxu0 %v266
    %704 = vmatprep.subr.mxu0 %v263
    %705 = vmatpush1.msra.mxu0 %v262
    %706 = vmatprep.subr.mxu0 %v259
    %707 = vmatpush1.msra.mxu0 %v258
    %708 = vmatprep.subr.mxu0 %v255
    %709 = vmatpush1.msra.mxu0 %v254
    %710 = vmatprep.subr.mxu0 %v251
    %711 = vmatpush1.msra.mxu0 %v250
    %712 = vmatprep.subr.mxu0 %v247
    %713 = vmatpush1.msra.mxu0 %v246
    %714 = vmatprep.subr.mxu0 %v243
    %715 = vmatpush1.msra.mxu0 %v242
    %716 = vmatprep.subr.mxu0 %v239
    %717 = vmatpush1.msra.mxu0 %v238
    %718 = vmatprep.subr.mxu0 %v235
    %719 = vmatpush1.msra.mxu0 %v234
    %720 = vmatprep.subr.mxu0 %v231
    %721 = vmatpush1.msra.mxu0 %v230
    %722 = vmatprep.subr.mxu0 %v227
    %723 = vmatpush1.msra.mxu0 %v226
    %724 = vmatprep.subr.mxu0 %v223
    %725 = vmatpush1.msra.mxu0 %v222
    %726 = vmatprep.subr.mxu0 %v219
    %727 = vmatpush1.msra.mxu0 %v218
    %728 = vmatprep.subr.mxu0 %v215
    %729 = vmatpush1.msra.mxu0 %v214
    %730 = vmatprep.subr.mxu0 %v211
    %731 = vmatpush1.msra.mxu0 %v210
    %732 = vmatprep.subr.mxu0 %v207
    %733 = vmatpush1.msra.mxu0 %v206
    %734 = vmatprep.subr.mxu0 %v331
    %735 = vmatpush2.msra.mxu0 %v330
    %736 = vmatprep.subr.mxu0 %v327
    %737 = vmatpush2.msra.mxu0 %v326
    %738 = vmatprep.subr.mxu0 %v323
    %739 = vmatpush2.msra.mxu0 %v322
    %740 = vmatprep.subr.mxu0 %v319
    %741 = vmatpush2.msra.mxu0 %v318
    %742 = vmatprep.subr.mxu0 %v315
    %743 = vmatpush2.msra.mxu0 %v314
    %744 = vmatprep.subr.mxu0 %v311
    %745 = vmatpush2.msra.mxu0 %v310
    %746 = vmatprep.subr.mxu0 %v307
    %747 = vmatpush2.msra.mxu0 %v306
    %748 = vmatprep.subr.mxu0 %v303
    %749 = vmatpush2.msra.mxu0 %v302
    %750 = vmatprep.subr.mxu0 %v299
    %751 = vmatpush2.msra.mxu0 %v298
    %752 = vmatprep.subr.mxu0 %v295
    %753 = vmatpush2.msra.mxu0 %v294
    %754 = vmatprep.subr.mxu0 %v291
    %755 = vmatpush2.msra.mxu0 %v290
    %756 = vmatprep.subr.mxu0 %v287
    %757 = vmatpush2.msra.mxu0 %v286
    %758 = vmatprep.subr.mxu0 %v283
    %759 = vmatpush2.msra.mxu0 %v282
    %760 = vmatprep.subr.mxu0 %v279
    %761 = vmatpush2.msra.mxu0 %v278
    %762 = vmatprep.subr.mxu0 %v275
    %763 = vmatpush2.msra.mxu0 %v274
    %764 = vmatprep.subr.mxu0 %v271
    %765 = vmatpush2.msra.mxu0 %v270
    %766 = vmatprep.mubr.f32.mxu0 %v74
    %767 = vmatmul.mubr.f32.gmra.mxu0 %v73
    %v768 = vpop.f32.mrf.mxu0
    %v769 = vadd.f32 %v698, %v768
    %v770 = vpop.f32.mrf.mxu0
    %v771 = vadd.f32 %v700, %v770
    %772 = vdwg.mxu0
    %773 = vmatprep.subr.mxu0 %v395
    %774 = vmatpush1.msra.mxu0 %v394
    %775 = vmatprep.subr.mxu0 %v391
    %776 = vmatpush1.msra.mxu0 %v390
    %777 = vmatprep.subr.mxu0 %v387
    %778 = vmatpush1.msra.mxu0 %v386
    %779 = vmatprep.subr.mxu0 %v383
    %780 = vmatpush1.msra.mxu0 %v382
    %781 = vmatprep.subr.mxu0 %v379
    %782 = vmatpush1.msra.mxu0 %v378
    %783 = vmatprep.subr.mxu0 %v375
    %784 = vmatpush1.msra.mxu0 %v374
    %785 = vmatprep.subr.mxu0 %v371
    %786 = vmatpush1.msra.mxu0 %v370
    %787 = vmatprep.subr.mxu0 %v367
    %788 = vmatpush1.msra.mxu0 %v366
    %789 = vmatprep.subr.mxu0 %v363
    %790 = vmatpush1.msra.mxu0 %v362
    %791 = vmatprep.subr.mxu0 %v359
    %792 = vmatpush1.msra.mxu0 %v358
    %793 = vmatprep.subr.mxu0 %v355
    %794 = vmatpush1.msra.mxu0 %v354
    %795 = vmatprep.subr.mxu0 %v351
    %796 = vmatpush1.msra.mxu0 %v350
    %797 = vmatprep.subr.mxu0 %v347
    %798 = vmatpush1.msra.mxu0 %v346
    %799 = vmatprep.subr.mxu0 %v343
    %800 = vmatpush1.msra.mxu0 %v342
    %801 = vmatprep.subr.mxu0 %v339
    %802 = vmatpush1.msra.mxu0 %v338
    %803 = vmatprep.subr.mxu0 %v335
    %804 = vmatpush1.msra.mxu0 %v334
    %805 = vmatprep.subr.mxu0 0.0
    %806 = vmatpush2.msra.mxu0 0.0
    %807 = vmatprep.subr.mxu0 0.0
    %808 = vmatpush2.msra.mxu0 0.0
    %809 = vmatprep.subr.mxu0 0.0
    %810 = vmatpush2.msra.mxu0 0.0
    %811 = vmatprep.subr.mxu0 0.0
    %812 = vmatpush2.msra.mxu0 0.0
    %813 = vmatprep.subr.mxu0 0.0
    %814 = vmatpush2.msra.mxu0 0.0
    %815 = vmatprep.subr.mxu0 0.0
    %816 = vmatpush2.msra.mxu0 0.0
    %817 = vmatprep.subr.mxu0 0.0
    %818 = vmatpush2.msra.mxu0 0.0
    %819 = vmatprep.subr.mxu0 0.0
    %820 = vmatpush2.msra.mxu0 0.0
    %821 = vmatprep.subr.mxu0 0.0
    %822 = vmatpush2.msra.mxu0 0.0
    %823 = vmatprep.subr.mxu0 0.0
    %824 = vmatpush2.msra.mxu0 0.0
    %825 = vmatprep.subr.mxu0 0.0
    %826 = vmatpush2.msra.mxu0 0.0
    %827 = vmatprep.subr.mxu0 0.0
    %828 = vmatpush2.msra.mxu0 0.0
    %829 = vmatprep.subr.mxu0 0.0
    %830 = vmatpush2.msra.mxu0 0.0
    %831 = vmatprep.subr.mxu0 0.0
    %832 = vmatpush2.msra.mxu0 0.0
    %833 = vmatprep.subr.mxu0 0.0
    %834 = vmatpush2.msra.mxu0 0.0
    %835 = vmatprep.subr.mxu0 0.0
    %836 = vmatpush2.msra.mxu0 0.0
    %837 = vmatprep.mubr.f32.mxu0 0.0
    %838 = vmatmul.mubr.f32.gmra.mxu0 %v75
    %v839 = vpop.f32.mrf.mxu0
    %v840 = vadd.f32 %v769, %v839
    %v841 = vpop.f32.mrf.mxu0
    %v842 = vadd.f32 %v771, %v841
    %843 = vdwg.mxu0
    %v844 = vmul.f32 %v627, 0.5
    %v845 = vmul.f32 %v629, 0.5
    %v846 = vmul.f32 %v840, 0.5
    %v847 = vmul.f32 %v842, 0.5
    %v848 = vmul.f32 %v627, 0.70710677
    %v849 = vmul.f32 %v629, 0.70710677
    %v850 = vmul.f32 %v840, 0.70710677
    %v851 = vmul.f32 %v842, 0.70710677
    %v852 = verf.f32.pop %v848
    %v853 = verf.f32.pop %v849
    %v854 = verf.f32.pop %v850
    %v855 = verf.f32.pop %v851
    %v856 = vadd.f32 %v852, 1.0
    %v857 = vadd.f32 %v853, 1.0
    %v858 = vadd.f32 %v854, 1.0
    %v859 = vadd.f32 %v855, 1.0
    %v860 = vmul.f32 %v844, %v856
    %v861 = vmul.f32 %v845, %v857
    %v862 = vmul.f32 %v846, %v858
    %v863 = vmul.f32 %v847, %v859
    %v864 = vld [vmem:[#allocation8] sm:$0xf]
    %v866 = vlaneseq
    %v867 = vshrl.u32 %v866, 7
    %v868 = vsub.s32 0, %v867
    %v869 = vrot.slane %v864, %v868
    %v870 = vlaneseq
    %v871 = vshrl.u32 %v870, 7
    %v872 = vsub.s32 1, %v871
    %v873 = vrot.slane %v864, %v872
    %v874 = vlaneseq
    %v875 = vshrl.u32 %v874, 7
    %v876 = vsub.s32 2, %v875
    %v877 = vrot.slane %v864, %v876
    %v878 = vlaneseq
    %v879 = vshrl.u32 %v878, 7
    %v880 = vsub.s32 3, %v879
    %v881 = vrot.slane %v864, %v880
    %v886 = vmul.f32 %v860, %v869
    %v887 = vmul.f32 %v861, %v873
    %v888 = vmul.f32 %v862, %v877
    %v889 = vmul.f32 %v863, %v881
    %v890 = vadd.f32 %v886, %v887
    %v891 = vadd.f32 %v890, %v888
    %v892 = vadd.f32 %v891, %v889
    %893 = vadd.xlane.f32.xlu0 %v892
    %v894 = vpop.xlane.xlu0 %893
    %v895 = vld [vmem:[#allocation2] sm:$0x1]
    %v897 = vlaneseq
    %v898 = vshrl.u32 %v897, 7
    %v899 = vsub.s32 0, %v898
    %v900 = vrot.slane %v895, %v899
    %v902 = vadd.f32 %v894, %v900
    %vm903 = vcmask 7168
    %904 = vst.msk [vmem:[%s5] sm:$0xff] %vm903, %v902
    // Predicated region
    $region38: #{tpu_custom_call.1} parent=1 // pred_check
      _
    $region39: #{tpu_custom_call.1} parent=1 // pred_check_branch
      %906 = sbr.rel (0) target = $region41
    $region40: #{tpu_custom_call.1} parent=1 // pred_region
      _
    $region41: #{tpu_custom_call.1} parent=1 // pred_fallthru
      _
    // Predicated region
    $region42: #{tpu_custom_call.1} parent=1 // pred_check
      _
    $region43: #{tpu_custom_call.1} parent=1 // pred_check_branch
      %908 = sbr.rel (0) target = $region45
    $region44: #{tpu_custom_call.1} parent=1 // pred_region
      _
    $region45: #{tpu_custom_call.1} parent=1 // pred_fallthru
      _
    %909 = vsyncpa [#allocation4], 1
    %910 = vsyncpa [#allocation6], 1
    %911 = vsyncpa [#allocation9], 1

</llo_original>
